<compile_context>
chip_gen: v7x
topology: tpu7x:2x2x1
jax: 0.10.0
libtpu: 0.0.40
codegen_flags: <defaults>
</compile_context>

<pallas_src>
import functools

import jax
import jax.numpy as jnp
import numpy as np
from jax.experimental import pallas as pl
from jax.experimental.pallas import tpu as pltpu

EPS = 1e-5
LANES = 128
K, STRIDE, PAD = 1, 2, 1


def _spatial_sel(in_size):
    """0/1 matrix S[in, out] for a k=1/stride=2/pad=1 conv along one spatial dim:
    output o samples input 2*o - 1; out-of-range rows stay all-zero (zero pad)."""
    out_size = (in_size + 2 * PAD - K) // STRIDE + 1
    S = np.zeros((in_size, out_size), dtype=np.float32)
    for o in range(out_size):
        i = STRIDE * o - PAD
        if 0 <= i < in_size:
            S[i, o] = 1.0
    return S, out_size


def _lane_sel(n, S):
    """Block-diagonal flattened-(n, h, w) selection, zero-padded to (LANES, LANES).
    Pad rows/columns are all-zero, so pad-lane garbage never propagates and
    padding-sampled outputs are exactly 0."""
    small = np.kron(np.eye(n, dtype=np.float32), np.kron(S, S))
    assert small.shape[0] <= LANES and small.shape[1] <= LANES
    P = np.zeros((LANES, LANES), dtype=np.float32)
    P[: small.shape[0], : small.shape[1]] = small
    return jnp.asarray(P)


def model_kernel(x_ref, w_ref, p1_ref, p2_ref, p3_ref, o_ref, *, cnt1, cnt2, cnt3):
    Wc = w_ref[...]  # (C, C) 1x1 conv weight (Cout, Cin)

    def conv(z, p_ref):
        # stride-2/pad-1 spatial sampling as a 0/1 gather-matmul (exact in f32),
        # then the 1x1 channel mix.  Conv bias dropped: it cancels exactly under
        # the following gamma=1/beta=0 training-mode BatchNorm.
        samp = jnp.dot(z, p_ref[...], preferred_element_type=jnp.float32)
        return jnp.dot(Wc, samp, preferred_element_type=jnp.float32)

    def bn_stats(z, cnt):
        # Pad lanes of z are exactly zero, so full-row sums / TRUE column count
        # give exact batch statistics.  var = E[z^2] - E[z]^2 keeps the two lane
        # reductions independent; clamp against cancellation.
        inv = 1.0 / cnt
        mean = jnp.sum(z, axis=1, keepdims=True) * inv
        msq = jnp.sum(z * z, axis=1, keepdims=True) * inv
        var = jnp.maximum(msq - mean * mean, 0.0)
        return mean, var

    x = x_ref[...]                                        # (C, 128) lane-dense

    v1 = conv(x, p1_ref)                                  # conv1(x)
    m1, var1 = bn_stats(v1, cnt1)
    v2 = (v1 - m1) * jax.lax.rsqrt(var1 + EPS)            # bn1

    v3 = conv(v2, p2_ref)                                 # conv1(v2)
    m3, var3 = bn_stats(v3, cnt2)
    inv_std3 = jax.lax.rsqrt(var3 + EPS)
    v4 = (v3 - m3) * inv_std3                             # bn2

    v5 = conv(v4, p3_ref)                                 # conv1(v4)
    m5, var5 = bn_stats(v5, cnt3)
    v6 = (v5 - m5) * jax.lax.rsqrt(var5 + EPS)            # bn3

    # bn4(v4) analytically: mean(v4) = 0 and E[v4^2] = var3 / (var3 + eps), so
    # no extra lane reduction / square pass on the serial critical path.
    bn4_scale = jax.lax.rsqrt(var3 * (inv_std3 * inv_std3) + EPS)
    o_ref[...] = v6 + v4 * bn4_scale


def model_forward(x, w, b):
    """Forward of Model.  `b` (conv bias) is accepted for interface parity but
    cancels exactly through the gamma=1/beta=0 training-mode BatchNorms, so it
    never ships to the kernel (validated against the biased reference below)."""
    del b
    N, C, H, Wd = x.shape
    assert H == Wd

    S1, s1 = _spatial_sel(H)    # 6 -> 4
    S2, s2 = _spatial_sel(s1)   # 4 -> 3
    S3, s3 = _spatial_sel(s2)   # 3 -> 3
    assert s2 == s3, "final residual add requires matching spatial dims"

    n0, n1, n2 = N * H * H, N * s1 * s1, N * s2 * s2
    assert n0 <= LANES, "single-tile kernel; see TODO below for larger N"
    # TODO(synk): for realistic N the block-diagonal P's grow O(N^2) and a single
    # grid point idles v7x's second TensorCore; switch to a batch-parallel grid
    # with a two-stage (sum / sum-of-squares) BN reduction before scaling.

    P1 = _lane_sel(N, S1)
    P2 = _lane_sel(N, S2)
    P3 = _lane_sel(N, S3)

    # NCHW -> lane-dense (C, 128) slab: channels on sublanes, (n, h, w) on lanes,
    # zero-padded to 128 so every kernel op is full-width.
    x_flat = jnp.transpose(x, (1, 0, 2, 3)).reshape(C, n0)
    x_pad = jnp.pad(x_flat, ((0, 0), (0, LANES - n0)))

    kernel = functools.partial(
        model_kernel, cnt1=float(n1), cnt2=float(n2), cnt3=float(n2))

    out_flat = pl.pallas_call(
        kernel,
        grid=(1,),
        in_specs=[
            pl.BlockSpec((C, LANES), lambda i: (0, 0)),
            pl.BlockSpec((C, C), lambda i: (0, 0)),
            pl.BlockSpec((LANES, LANES), lambda i: (0, 0)),
            pl.BlockSpec((LANES, LANES), lambda i: (0, 0)),
            pl.BlockSpec((LANES, LANES), lambda i: (0, 0)),
        ],
        out_specs=pl.BlockSpec((C, LANES), lambda i: (0, 0)),
        out_shape=jax.ShapeDtypeStruct((C, LANES), jnp.float32),
        compiler_params=pltpu.CompilerParams(
            dimension_semantics=("arbitrary",)),
    )(x_pad, w, P1, P2, P3)

    # Lane-dense output slab -> NCHW; pad columns are discarded here.
    return jnp.transpose(out_flat[:, :n2].reshape(C, N, s2, s2), (1, 0, 2, 3))


if __name__ == "__main__":
    key = jax.random.PRNGKey(0)
    k1, k2, k3 = jax.random.split(key, 3)

    N, C, H = 2, 8, 6  # spatial 6 -> 4 -> 3 -> 3 so the residual add is well-formed
    x = jax.random.normal(k1, (N, C, H, H), jnp.float32)

    # Conv2d(8, 8, 1)-style deterministic init (uniform +-1/sqrt(fan_in))
    bound = 1.0 / (C ** 0.5)
    w = jax.random.uniform(k2, (C, C), jnp.float32, -bound, bound)
    b = jax.random.uniform(k3, (C,), jnp.float32, -bound, bound)

    out = jax.jit(model_forward)(x, w, b)
    jax.block_until_ready(out)

    # Pure-JAX reference with the full original semantics (conv WITH bias,
    # standard two-pass BN) -- validates the bias-cancellation, the analytic
    # bn4(v4) and the lane-padding / true-count statistics used in the kernel.
    def conv_ref(z):
        y = jax.lax.conv_general_dilated(
            z, w.reshape(C, C, 1, 1), window_strides=(2, 2),
            padding=((1, 1), (1, 1)),
            dimension_numbers=("NCHW", "OIHW", "NCHW"))
        return y + b.reshape(1, C, 1, 1)

    def bn_ref(z):
        m = z.mean(axis=(0, 2, 3), keepdims=True)
        v = ((z - m) ** 2).mean(axis=(0, 2, 3), keepdims=True)
        return (z - m) * jax.lax.rsqrt(v + EPS)

    v1 = conv_ref(x); v2 = bn_ref(v1)
    v3 = conv_ref(v2); v4 = bn_ref(v3)
    v5 = conv_ref(v4); v6 = bn_ref(v5)
    ref = v6 + bn_ref(v4)

    assert out.shape == (N, C, 3, 3)
    assert jnp.allclose(out, ref, atol=1e-4, rtol=1e-4), float(jnp.abs(out - ref).max())
    print("KERNEL_OK")
</pallas_src>

<mosaic_0001>
module attributes {stable_mosaic.version = 11 : i64} {
  func.func @model_kernel(%arg0: i32, %arg1: memref<8x128xf32, #tpu.memory_space<vmem>>, %arg2: memref<8x8xf32, #tpu.memory_space<vmem>>, %arg3: memref<128x128xf32, #tpu.memory_space<vmem>>, %arg4: memref<128x128xf32, #tpu.memory_space<vmem>>, %arg5: memref<128x128xf32, #tpu.memory_space<vmem>>, %arg6: memref<8x128xf32, #tpu.memory_space<vmem>>) attributes {dimension_semantics = [#tpu.dimension_semantics<arbitrary>], iteration_bounds = array<i64: 1>, scalar_prefetch = 0 : i64, scratch_operands = 0 : i64, tpu.core_type = #tpu.core_type<tc>, window_params = [{pipeline_mode = #tpu.pipeline_mode<synchronous>, transform_indices = @transform_0, window_bounds = array<i64: 8, 128>}, {pipeline_mode = #tpu.pipeline_mode<synchronous>, transform_indices = @transform_1, window_bounds = array<i64: 8, 8>}, {pipeline_mode = #tpu.pipeline_mode<synchronous>, transform_indices = @transform_2, window_bounds = array<i64: 128, 128>}, {pipeline_mode = #tpu.pipeline_mode<synchronous>, transform_indices = @transform_3, window_bounds = array<i64: 128, 128>}, {pipeline_mode = #tpu.pipeline_mode<synchronous>, transform_indices = @transform_4, window_bounds = array<i64: 128, 128>}, {pipeline_mode = #tpu.pipeline_mode<synchronous>, transform_indices = @transform_5, window_bounds = array<i64: 8, 128>}]} {
    %c0 = arith.constant 0 : index
    %c0_0 = arith.constant 0 : index
    %0 = vector.load %arg2[%c0, %c0_0] : memref<8x8xf32, #tpu.memory_space<vmem>>, vector<8x8xf32>
    %c0_1 = arith.constant 0 : index
    %c0_2 = arith.constant 0 : index
    %1 = vector.load %arg1[%c0_1, %c0_2] : memref<8x128xf32, #tpu.memory_space<vmem>>, vector<8x128xf32>
    %c0_3 = arith.constant 0 : index
    %c0_4 = arith.constant 0 : index
    %2 = vector.load %arg3[%c0_3, %c0_4] : memref<128x128xf32, #tpu.memory_space<vmem>>, vector<128x128xf32>
    %cst = arith.constant dense<0.000000e+00> : vector<8x128xf32>
    %3 = tpu.matmul %1, %2, %cst {dimension_numbers = #tpu.dot_dimension_numbers<[1], [0], [0], [1], [0, 0, 1, 1], [], []>} : vector<8x128xf32>, vector<128x128xf32>, vector<8x128xf32> -> vector<8x128xf32>
    %cst_5 = arith.constant dense<0.000000e+00> : vector<8x128xf32>
    %4 = tpu.matmul %0, %3, %cst_5 {dimension_numbers = #tpu.dot_dimension_numbers<[1], [0], [0], [1], [0, 0, 1, 1], [], []>} : vector<8x8xf32>, vector<8x128xf32>, vector<8x128xf32> -> vector<8x128xf32>
    %cst_6 = arith.constant dense<0.000000e+00> : vector<8xf32>
    %5 = vector.multi_reduction <add>, %4, %cst_6 [1] : vector<8x128xf32> to vector<8xf32>
    %6 = vector.shape_cast %5 : vector<8xf32> to vector<8x1xf32>
    %cst_7 = arith.constant 3.125000e-02 : f32
    %7 = vector.broadcast %cst_7 : f32 to vector<8x1xf32>
    %8 = arith.mulf %6, %7 : vector<8x1xf32>
    %9 = arith.mulf %4, %4 : vector<8x128xf32>
    %cst_8 = arith.constant dense<0.000000e+00> : vector<8xf32>
    %10 = vector.multi_reduction <add>, %9, %cst_8 [1] : vector<8x128xf32> to vector<8xf32>
    %11 = vector.shape_cast %10 : vector<8xf32> to vector<8x1xf32>
    %cst_9 = arith.constant 3.125000e-02 : f32
    %12 = vector.broadcast %cst_9 : f32 to vector<8x1xf32>
    %13 = arith.mulf %11, %12 : vector<8x1xf32>
    %14 = arith.mulf %8, %8 : vector<8x1xf32>
    %15 = arith.subf %13, %14 : vector<8x1xf32>
    %cst_10 = arith.constant 0.000000e+00 : f32
    %16 = vector.broadcast %cst_10 : f32 to vector<8x1xf32>
    %17 = arith.maximumf %15, %16 : vector<8x1xf32>
    %18 = vector.broadcast %8 : vector<8x1xf32> to vector<8x128xf32>
    %19 = arith.subf %4, %18 : vector<8x128xf32>
    %cst_11 = arith.constant 9.99999974E-6 : f32
    %20 = vector.broadcast %cst_11 : f32 to vector<8x1xf32>
    %21 = arith.addf %17, %20 : vector<8x1xf32>
    %22 = math.rsqrt %21 : vector<8x1xf32>
    %23 = vector.broadcast %22 : vector<8x1xf32> to vector<8x128xf32>
    %24 = arith.mulf %19, %23 : vector<8x128xf32>
    %c0_12 = arith.constant 0 : index
    %c0_13 = arith.constant 0 : index
    %25 = vector.load %arg4[%c0_12, %c0_13] : memref<128x128xf32, #tpu.memory_space<vmem>>, vector<128x128xf32>
    %cst_14 = arith.constant dense<0.000000e+00> : vector<8x128xf32>
    %26 = tpu.matmul %24, %25, %cst_14 {dimension_numbers = #tpu.dot_dimension_numbers<[1], [0], [0], [1], [0, 0, 1, 1], [], []>} : vector<8x128xf32>, vector<128x128xf32>, vector<8x128xf32> -> vector<8x128xf32>
    %cst_15 = arith.constant dense<0.000000e+00> : vector<8x128xf32>
    %27 = tpu.matmul %0, %26, %cst_15 {dimension_numbers = #tpu.dot_dimension_numbers<[1], [0], [0], [1], [0, 0, 1, 1], [], []>} : vector<8x8xf32>, vector<8x128xf32>, vector<8x128xf32> -> vector<8x128xf32>
    %cst_16 = arith.constant dense<0.000000e+00> : vector<8xf32>
    %28 = vector.multi_reduction <add>, %27, %cst_16 [1] : vector<8x128xf32> to vector<8xf32>
    %29 = vector.shape_cast %28 : vector<8xf32> to vector<8x1xf32>
    %cst_17 = arith.constant 0.055555556 : f32
    %30 = vector.broadcast %cst_17 : f32 to vector<8x1xf32>
    %31 = arith.mulf %29, %30 : vector<8x1xf32>
    %32 = arith.mulf %27, %27 : vector<8x128xf32>
    %cst_18 = arith.constant dense<0.000000e+00> : vector<8xf32>
    %33 = vector.multi_reduction <add>, %32, %cst_18 [1] : vector<8x128xf32> to vector<8xf32>
    %34 = vector.shape_cast %33 : vector<8xf32> to vector<8x1xf32>
    %cst_19 = arith.constant 0.055555556 : f32
    %35 = vector.broadcast %cst_19 : f32 to vector<8x1xf32>
    %36 = arith.mulf %34, %35 : vector<8x1xf32>
    %37 = arith.mulf %31, %31 : vector<8x1xf32>
    %38 = arith.subf %36, %37 : vector<8x1xf32>
    %cst_20 = arith.constant 0.000000e+00 : f32
    %39 = vector.broadcast %cst_20 : f32 to vector<8x1xf32>
    %40 = arith.maximumf %38, %39 : vector<8x1xf32>
    %cst_21 = arith.constant 9.99999974E-6 : f32
    %41 = vector.broadcast %cst_21 : f32 to vector<8x1xf32>
    %42 = arith.addf %40, %41 : vector<8x1xf32>
    %43 = math.rsqrt %42 : vector<8x1xf32>
    %44 = vector.broadcast %31 : vector<8x1xf32> to vector<8x128xf32>
    %45 = arith.subf %27, %44 : vector<8x128xf32>
    %46 = vector.broadcast %43 : vector<8x1xf32> to vector<8x128xf32>
    %47 = arith.mulf %45, %46 : vector<8x128xf32>
    %c0_22 = arith.constant 0 : index
    %c0_23 = arith.constant 0 : index
    %48 = vector.load %arg5[%c0_22, %c0_23] : memref<128x128xf32, #tpu.memory_space<vmem>>, vector<128x128xf32>
    %cst_24 = arith.constant dense<0.000000e+00> : vector<8x128xf32>
    %49 = tpu.matmul %47, %48, %cst_24 {dimension_numbers = #tpu.dot_dimension_numbers<[1], [0], [0], [1], [0, 0, 1, 1], [], []>} : vector<8x128xf32>, vector<128x128xf32>, vector<8x128xf32> -> vector<8x128xf32>
    %cst_25 = arith.constant dense<0.000000e+00> : vector<8x128xf32>
    %50 = tpu.matmul %0, %49, %cst_25 {dimension_numbers = #tpu.dot_dimension_numbers<[1], [0], [0], [1], [0, 0, 1, 1], [], []>} : vector<8x8xf32>, vector<8x128xf32>, vector<8x128xf32> -> vector<8x128xf32>
    %cst_26 = arith.constant dense<0.000000e+00> : vector<8xf32>
    %51 = vector.multi_reduction <add>, %50, %cst_26 [1] : vector<8x128xf32> to vector<8xf32>
    %52 = vector.shape_cast %51 : vector<8xf32> to vector<8x1xf32>
    %cst_27 = arith.constant 0.055555556 : f32
    %53 = vector.broadcast %cst_27 : f32 to vector<8x1xf32>
    %54 = arith.mulf %52, %53 : vector<8x1xf32>
    %55 = arith.mulf %50, %50 : vector<8x128xf32>
    %cst_28 = arith.constant dense<0.000000e+00> : vector<8xf32>
    %56 = vector.multi_reduction <add>, %55, %cst_28 [1] : vector<8x128xf32> to vector<8xf32>
    %57 = vector.shape_cast %56 : vector<8xf32> to vector<8x1xf32>
    %cst_29 = arith.constant 0.055555556 : f32
    %58 = vector.broadcast %cst_29 : f32 to vector<8x1xf32>
    %59 = arith.mulf %57, %58 : vector<8x1xf32>
    %60 = arith.mulf %54, %54 : vector<8x1xf32>
    %61 = arith.subf %59, %60 : vector<8x1xf32>
    %cst_30 = arith.constant 0.000000e+00 : f32
    %62 = vector.broadcast %cst_30 : f32 to vector<8x1xf32>
    %63 = arith.maximumf %61, %62 : vector<8x1xf32>
    %64 = vector.broadcast %54 : vector<8x1xf32> to vector<8x128xf32>
    %65 = arith.subf %50, %64 : vector<8x128xf32>
    %cst_31 = arith.constant 9.99999974E-6 : f32
    %66 = vector.broadcast %cst_31 : f32 to vector<8x1xf32>
    %67 = arith.addf %63, %66 : vector<8x1xf32>
    %68 = math.rsqrt %67 : vector<8x1xf32>
    %69 = vector.broadcast %68 : vector<8x1xf32> to vector<8x128xf32>
    %70 = arith.mulf %65, %69 : vector<8x128xf32>
    %71 = arith.mulf %43, %43 : vector<8x1xf32>
    %72 = arith.mulf %40, %71 : vector<8x1xf32>
    %cst_32 = arith.constant 9.99999974E-6 : f32
    %73 = vector.broadcast %cst_32 : f32 to vector<8x1xf32>
    %74 = arith.addf %72, %73 : vector<8x1xf32>
    %75 = math.rsqrt %74 : vector<8x1xf32>
    %76 = vector.broadcast %75 : vector<8x1xf32> to vector<8x128xf32>
    %77 = arith.mulf %47, %76 : vector<8x128xf32>
    %78 = arith.addf %70, %77 : vector<8x128xf32>
    %c0_33 = arith.constant 0 : index
    %c0_34 = arith.constant 0 : index
    %79 = vector.load %arg6[%c0_33, %c0_34] : memref<8x128xf32, #tpu.memory_space<vmem>>, vector<8x128xf32>
    tpu.vector_store %arg6[%c0_33, %c0_34], %78 {strides = array<i32>} : memref<8x128xf32, #tpu.memory_space<vmem>>, vector<8x128xf32>,
    return
  }
  func.func @transform_0(%arg0: i32) -> (i32, i32) {
    %c0_i32 = arith.constant 0 : i32
    %c0_i32_0 = arith.constant 0 : i32
    %c0_i32_1 = arith.constant 0 : i32
    return %c0_i32, %c0_i32_0 : i32, i32
  }
  func.func @transform_1(%arg0: i32) -> (i32, i32) {
    %c0_i32 = arith.constant 0 : i32
    %c0_i32_0 = arith.constant 0 : i32
    %c0_i32_1 = arith.constant 0 : i32
    return %c0_i32, %c0_i32_0 : i32, i32
  }
  func.func @transform_2(%arg0: i32) -> (i32, i32) {
    %c0_i32 = arith.constant 0 : i32
    %c0_i32_0 = arith.constant 0 : i32
    %c0_i32_1 = arith.constant 0 : i32
    return %c0_i32, %c0_i32_0 : i32, i32
  }
  func.func @transform_3(%arg0: i32) -> (i32, i32) {
    %c0_i32 = arith.constant 0 : i32
    %c0_i32_0 = arith.constant 0 : i32
    %c0_i32_1 = arith.constant 0 : i32
    return %c0_i32, %c0_i32_0 : i32, i32
  }
  func.func @transform_4(%arg0: i32) -> (i32, i32) {
    %c0_i32 = arith.constant 0 : i32
    %c0_i32_0 = arith.constant 0 : i32
    %c0_i32_1 = arith.constant 0 : i32
    return %c0_i32, %c0_i32_0 : i32, i32
  }
  func.func @transform_5(%arg0: i32) -> (i32, i32) {
    %c0_i32 = arith.constant 0 : i32
    %c0_i32_0 = arith.constant 0 : i32
    %c0_i32_1 = arith.constant 0 : i32
    return %c0_i32, %c0_i32_0 : i32, i32
  }
}

</mosaic_0001>

<llo_original>
// kernel: model_forward.1
$region0: #{model_forward.1}
  #allocation0 [shape = 'u32[]', space=smem, size = 0x4, offset = 0x4, fixed_abs, tag = 'smem constant byte address 0x4 - core index']
  #allocation1 [shape = 'u32[144,128]{1,0:T(1,128)}', space=vmem, size = 0x12000, scoped, tag = 'internal scratch']
  %s0 = inlined_call_operand.vmem [shape: f32[8,128], index: 0, kind: input, shape index: {}]
  %s1 = inlined_call_operand.vmem [shape: f32[8,8], index: 1, kind: input, shape index: {}]
  %s2 = inlined_call_operand.hbm [shape: f32[128,128], index: 2, kind: input, shape index: {}]
  %s3 = inlined_call_operand.vmem [shape: f32[128,128], index: 3, kind: input, shape index: {}]
  %s4 = inlined_call_operand.vmem [shape: f32[128,128], index: 4, kind: input, shape index: {}]
  %s5 = inlined_call_operand.vmem [shape: f32[8,128], index: 5, kind: output, shape index: {}]
  %s6 = sld [smem:[#allocation0]]
  $region34: #{model_forward.1} parent=0
    _
  %s8 = ssub.s32 1, %s6
  %s9 = scalar_select 0, %s8, %s6
  $region1: #{model_forward.1} parent=0
    #allocation2 [shape = 'u8[65536]{0}', space=vmem, size = 0x10000, scoped, tag = 'input window, operand 2, single buffered']
    #allocation3 [shape = 's32[1]{0}', space=sflag, size = 0x4, scoped, tag = 'scoped memory for model_forward.1']
    %10 = vsyncpa [#allocation3], 0
    // Predicated region
    $region2: #{model_forward.1} parent=1 // pred_check
      _
    $region3: #{model_forward.1} parent=1 // pred_check_branch
      %12 = sbr.rel (0) target = $region5
    $region4: #{model_forward.1} parent=1 // pred_region
      _
    $region5: #{model_forward.1} parent=1 // pred_fallthru
      _
    // Predicated region
    $region6: #{model_forward.1} parent=1 // pred_check
      _
    $region7: #{model_forward.1} parent=1 // pred_check_branch
      %14 = sbr.rel (0) target = $region9
    $region8: #{model_forward.1} parent=1 // pred_region
      _
    $region9: #{model_forward.1} parent=1 // pred_fallthru
      _
    // Predicated region
    $region10: #{model_forward.1} parent=1 // pred_check
      _
    $region11: #{model_forward.1} parent=1 // pred_check_branch
      %16 = sbr.rel (0) target = $region13
    $region12: #{model_forward.1} parent=1 // pred_region
      %s18 = ssub.s32 2048, 2048
      %19 = vsyncadd [#allocation3], %s18
      %s20 = sshll.u32 [#allocation2], 4
      %s21 = int_to_ptr.vmem [resolvable:$true] %s20
      %26 = dma.hbm_to_vmem [thread:$0]  %s2, 2048, %s21, [#allocation3], 128, 128, 8
    $region13: #{model_forward.1} parent=1 // pred_fallthru
      _
    // Predicated region
    $region14: #{model_forward.1} parent=1 // pred_check
      _
    $region15: #{model_forward.1} parent=1 // pred_check_branch
      %28 = sbr.rel (0) target = $region17
    $region16: #{model_forward.1} parent=1 // pred_region
      _
    $region17: #{model_forward.1} parent=1 // pred_fallthru
      _
    // Predicated region
    $region18: #{model_forward.1} parent=1 // pred_check
      _
    $region19: #{model_forward.1} parent=1 // pred_check_branch
      %30 = sbr.rel (0) target = $region21
    $region20: #{model_forward.1} parent=1 // pred_region
      _
    $region21: #{model_forward.1} parent=1 // pred_fallthru
      _
    // Predicated region
    $region22: #{model_forward.1} parent=1 // pred_check
      _
    $region23: #{model_forward.1} parent=1 // pred_check_branch
      %32 = sbr.rel (0) target = $region25
    $region24: #{model_forward.1} parent=1 // pred_region
      %33 = dma.done [#allocation3], 2048
    $region25: #{model_forward.1} parent=1 // pred_fallthru
      _
    %v34 = vld [vmem:[%s1] sm:$0xff]
    %v35 = vld [vmem:[%s0] sm:$0xff]
    %v36 = vld [vmem:[#allocation2] sm:$0xff]
    %v37 = vld [vmem:[#allocation2 + $0x8] sm:$0xff]
    %v38 = vld [vmem:[#allocation2 + $0x10] sm:$0xff]
    %v39 = vld [vmem:[#allocation2 + $0x18] sm:$0xff]
    %v40 = vld [vmem:[#allocation2 + $0x20] sm:$0xff]
    %v41 = vld [vmem:[#allocation2 + $0x28] sm:$0xff]
    %v42 = vld [vmem:[#allocation2 + $0x30] sm:$0xff]
    %v43 = vld [vmem:[#allocation2 + $0x38] sm:$0xff]
    %v44 = vld [vmem:[#allocation2 + $0x40] sm:$0xff]
    %v45 = vld [vmem:[#allocation2 + $0x48] sm:$0xff]
    %v46 = vld [vmem:[#allocation2 + $0x50] sm:$0xff]
    %v47 = vld [vmem:[#allocation2 + $0x58] sm:$0xff]
    %v48 = vld [vmem:[#allocation2 + $0x60] sm:$0xff]
    %v49 = vld [vmem:[#allocation2 + $0x68] sm:$0xff]
    %v50 = vld [vmem:[#allocation2 + $0x70] sm:$0xff]
    %v51 = vld [vmem:[#allocation2 + $0x78] sm:$0xff]
    %52 = vmatprep.subr.mxu0 0.0
    %53 = vmatpush1.msra.mxu0 %v36
    %54 = vmatprep.subr.mxu0 0.0
    %55 = vmatpush1.msra.mxu0 %v37
    %56 = vmatprep.subr.mxu0 0.0
    %57 = vmatpush1.msra.mxu0 %v38
    %58 = vmatprep.subr.mxu0 0.0
    %59 = vmatpush1.msra.mxu0 %v39
    %60 = vmatprep.subr.mxu0 0.0
    %61 = vmatpush1.msra.mxu0 %v40
    %62 = vmatprep.subr.mxu0 0.0
    %63 = vmatpush1.msra.mxu0 %v41
    %64 = vmatprep.subr.mxu0 0.0
    %65 = vmatpush1.msra.mxu0 %v42
    %66 = vmatprep.subr.mxu0 0.0
    %67 = vmatpush1.msra.mxu0 %v43
    %68 = vmatprep.subr.mxu0 0.0
    %69 = vmatpush1.msra.mxu0 %v44
    %70 = vmatprep.subr.mxu0 0.0
    %71 = vmatpush1.msra.mxu0 %v45
    %72 = vmatprep.subr.mxu0 0.0
    %73 = vmatpush1.msra.mxu0 %v46
    %74 = vmatprep.subr.mxu0 0.0
    %75 = vmatpush1.msra.mxu0 %v47
    %76 = vmatprep.subr.mxu0 0.0
    %77 = vmatpush1.msra.mxu0 %v48
    %78 = vmatprep.subr.mxu0 0.0
    %79 = vmatpush1.msra.mxu0 %v49
    %80 = vmatprep.subr.mxu0 0.0
    %81 = vmatpush1.msra.mxu0 %v50
    %82 = vmatprep.subr.mxu0 0.0
    %83 = vmatpush1.msra.mxu0 %v51
    %84 = vmatprep.subr.mxu0 0.0
    %85 = vmatpush1.msra.mxu0 0.0
    %86 = vmatprep.subr.mxu0 0.0
    %87 = vmatpush1.msra.mxu0 0.0
    %88 = vmatprep.subr.mxu0 0.0
    %89 = vmatpush1.msra.mxu0 0.0
    %90 = vmatprep.subr.mxu0 0.0
    %91 = vmatpush1.msra.mxu0 0.0
    %92 = vmatprep.subr.mxu0 0.0
    %93 = vmatpush1.msra.mxu0 0.0
    %94 = vmatprep.subr.mxu0 0.0
    %95 = vmatpush1.msra.mxu0 0.0
    %96 = vmatprep.subr.mxu0 0.0
    %97 = vmatpush1.msra.mxu0 0.0
    %98 = vmatprep.subr.mxu0 0.0
    %99 = vmatpush1.msra.mxu0 0.0
    %100 = vmatprep.subr.mxu0 0.0
    %101 = vmatpush1.msra.mxu0 0.0
    %102 = vmatprep.subr.mxu0 0.0
    %103 = vmatpush1.msra.mxu0 0.0
    %104 = vmatprep.subr.mxu0 0.0
    %105 = vmatpush1.msra.mxu0 0.0
    %106 = vmatprep.subr.mxu0 0.0
    %107 = vmatpush1.msra.mxu0 0.0
    %108 = vmatprep.subr.mxu0 0.0
    %109 = vmatpush1.msra.mxu0 0.0
    %110 = vmatprep.subr.mxu0 0.0
    %111 = vmatpush1.msra.mxu0 0.0
    %112 = vmatprep.subr.mxu0 0.0
    %113 = vmatpush1.msra.mxu0 0.0
    %114 = vmatprep.subr.mxu0 0.0
    %115 = vmatpush1.msra.mxu0 0.0
    %116 = vmatprep.mubr.f32.mxu0 0.0
    %117 = vmatmul.mubr.f32.gmra.mrb[0].mxu0 %v35
    %v118 = vpop.f32.mrb[0].mxu0
    %v119 = vadd.f32 0.0, %v118
    %v120 = vpop.f32.mrb[0].mxu0
    %121 = vdwg.mxu0
    %vm122 = vcmask 64512
    %v124 = vsel %vm122, %v34, 0
    %126 = vmatprep.subr.mxu0 0.0
    %127 = vmatpush1.msra.mxu0 %v119
    %128 = vmatprep.subr.mxu0 0.0
    %129 = vmatpush1.msra.mxu0 0.0
    %130 = vmatprep.subr.mxu0 0.0
    %131 = vmatpush1.msra.mxu0 0.0
    %132 = vmatprep.subr.mxu0 0.0
    %133 = vmatpush1.msra.mxu0 0.0
    %134 = vmatprep.subr.mxu0 0.0
    %135 = vmatpush1.msra.mxu0 0.0
    %136 = vmatprep.subr.mxu0 0.0
    %137 = vmatpush1.msra.mxu0 0.0
    %138 = vmatprep.subr.mxu0 0.0
    %139 = vmatpush1.msra.mxu0 0.0
    %140 = vmatprep.subr.mxu0 0.0
    %141 = vmatpush1.msra.mxu0 0.0
    %142 = vmatprep.subr.mxu0 0.0
    %143 = vmatpush1.msra.mxu0 0.0
    %144 = vmatprep.subr.mxu0 0.0
    %145 = vmatpush1.msra.mxu0 0.0
    %146 = vmatprep.subr.mxu0 0.0
    %147 = vmatpush1.msra.mxu0 0.0
    %148 = vmatprep.subr.mxu0 0.0
    %149 = vmatpush1.msra.mxu0 0.0
    %150 = vmatprep.subr.mxu0 0.0
    %151 = vmatpush1.msra.mxu0 0.0
    %152 = vmatprep.subr.mxu0 0.0
    %153 = vmatpush1.msra.mxu0 0.0
    %154 = vmatprep.subr.mxu0 0.0
    %155 = vmatpush1.msra.mxu0 0.0
    %156 = vmatprep.subr.mxu0 0.0
    %157 = vmatpush1.msra.mxu0 0.0
    %158 = vmatprep.subr.mxu0 0.0
    %159 = vmatpush1.msra.mxu0 0.0
    %160 = vmatprep.subr.mxu0 0.0
    %161 = vmatpush1.msra.mxu0 0.0
    %162 = vmatprep.subr.mxu0 0.0
    %163 = vmatpush1.msra.mxu0 0.0
    %164 = vmatprep.subr.mxu0 0.0
    %165 = vmatpush1.msra.mxu0 0.0
    %166 = vmatprep.subr.mxu0 0.0
    %167 = vmatpush1.msra.mxu0 0.0
    %168 = vmatprep.subr.mxu0 0.0
    %169 = vmatpush1.msra.mxu0 0.0
    %170 = vmatprep.subr.mxu0 0.0
    %171 = vmatpush1.msra.mxu0 0.0
    %172 = vmatprep.subr.mxu0 0.0
    %173 = vmatpush1.msra.mxu0 0.0
    %174 = vmatprep.subr.mxu0 0.0
    %175 = vmatpush1.msra.mxu0 0.0
    %176 = vmatprep.subr.mxu0 0.0
    %177 = vmatpush1.msra.mxu0 0.0
    %178 = vmatprep.subr.mxu0 0.0
    %179 = vmatpush1.msra.mxu0 0.0
    %180 = vmatprep.subr.mxu0 0.0
    %181 = vmatpush1.msra.mxu0 0.0
    %182 = vmatprep.subr.mxu0 0.0
    %183 = vmatpush1.msra.mxu0 0.0
    %184 = vmatprep.subr.mxu0 0.0
    %185 = vmatpush1.msra.mxu0 0.0
    %186 = vmatprep.subr.mxu0 0.0
    %187 = vmatpush1.msra.mxu0 0.0
    %188 = vmatprep.subr.mxu0 0.0
    %189 = vmatpush1.msra.mxu0 0.0
    %190 = vmatprep.mubr.f32.mxu0 0.0
    %191 = vmatmul.mubr.f32.gmra.mrb[0].mxu0 %v124
    %v192 = vpop.f32.mrb[0].mxu0
    %v193 = vadd.f32 0.0, %v192
    %v194 = vpop.f32.mrb[0].mxu0
    %195 = vdwg.mxu0
    %196 = vadd.xlane.f32.xlu0 %v193
    %v197 = vpop.xlane.xlu0 %196
    %v198 = vmul.f32 %v197, 0.03125
    %v199 = vmul.f32 %v193, %v193
    %200 = vadd.xlane.f32.xlu0 %v199
    %v201 = vpop.xlane.xlu0 %200
    %v202 = vmul.f32 %v201, 0.03125
    %v203 = vmul.f32 %v198, %v198
    %v204 = vsub.f32 %v202, %v203
    %v205 = vmax.f32 %v204, 0.0
    %v206 = vsub.f32 %v193, %v198
    %v207 = vadd.f32 %v205, 1e-05
    %v208 = vrsqrt.pop %v207
    %v209 = vmul.f32 %v206, %v208
    %v210 = vld [vmem:[%s3] sm:$0xff]
    %v211 = vld [vmem:[%s3 + $0x8] sm:$0xff]
    %v212 = vld [vmem:[%s3 + $0x10] sm:$0xff]
    %v213 = vld [vmem:[%s3 + $0x18] sm:$0xff]
    %v214 = vld [vmem:[%s3 + $0x20] sm:$0xff]
    %v215 = vld [vmem:[%s3 + $0x28] sm:$0xff]
    %v216 = vld [vmem:[%s3 + $0x30] sm:$0xff]
    %v217 = vld [vmem:[%s3 + $0x38] sm:$0xff]
    %v218 = vld [vmem:[%s3 + $0x40] sm:$0xff]
    %v219 = vld [vmem:[%s3 + $0x48] sm:$0xff]
    %v220 = vld [vmem:[%s3 + $0x50] sm:$0xff]
    %v221 = vld [vmem:[%s3 + $0x58] sm:$0xff]
    %v222 = vld [vmem:[%s3 + $0x60] sm:$0xff]
    %v223 = vld [vmem:[%s3 + $0x68] sm:$0xff]
    %v224 = vld [vmem:[%s3 + $0x70] sm:$0xff]
    %v225 = vld [vmem:[%s3 + $0x78] sm:$0xff]
    %226 = vmatprep.subr.mxu0 0.0
    %227 = vmatpush1.msra.mxu0 %v210
    %228 = vmatprep.subr.mxu0 0.0
    %229 = vmatpush1.msra.mxu0 %v211
    %230 = vmatprep.subr.mxu0 0.0
    %231 = vmatpush1.msra.mxu0 %v212
    %232 = vmatprep.subr.mxu0 0.0
    %233 = vmatpush1.msra.mxu0 %v213
    %234 = vmatprep.subr.mxu0 0.0
    %235 = vmatpush1.msra.mxu0 %v214
    %236 = vmatprep.subr.mxu0 0.0
    %237 = vmatpush1.msra.mxu0 %v215
    %238 = vmatprep.subr.mxu0 0.0
    %239 = vmatpush1.msra.mxu0 %v216
    %240 = vmatprep.subr.mxu0 0.0
    %241 = vmatpush1.msra.mxu0 %v217
    %242 = vmatprep.subr.mxu0 0.0
    %243 = vmatpush1.msra.mxu0 %v218
    %244 = vmatprep.subr.mxu0 0.0
    %245 = vmatpush1.msra.mxu0 %v219
    %246 = vmatprep.subr.mxu0 0.0
    %247 = vmatpush1.msra.mxu0 %v220
    %248 = vmatprep.subr.mxu0 0.0
    %249 = vmatpush1.msra.mxu0 %v221
    %250 = vmatprep.subr.mxu0 0.0
    %251 = vmatpush1.msra.mxu0 %v222
    %252 = vmatprep.subr.mxu0 0.0
    %253 = vmatpush1.msra.mxu0 %v223
    %254 = vmatprep.subr.mxu0 0.0
    %255 = vmatpush1.msra.mxu0 %v224
    %256 = vmatprep.subr.mxu0 0.0
    %257 = vmatpush1.msra.mxu0 %v225
    %258 = vmatprep.subr.mxu0 0.0
    %259 = vmatpush1.msra.mxu0 0.0
    %260 = vmatprep.subr.mxu0 0.0
    %261 = vmatpush1.msra.mxu0 0.0
    %262 = vmatprep.subr.mxu0 0.0
    %263 = vmatpush1.msra.mxu0 0.0
    %264 = vmatprep.subr.mxu0 0.0
    %265 = vmatpush1.msra.mxu0 0.0
    %266 = vmatprep.subr.mxu0 0.0
    %267 = vmatpush1.msra.mxu0 0.0
    %268 = vmatprep.subr.mxu0 0.0
    %269 = vmatpush1.msra.mxu0 0.0
    %270 = vmatprep.subr.mxu0 0.0
    %271 = vmatpush1.msra.mxu0 0.0
    %272 = vmatprep.subr.mxu0 0.0
    %273 = vmatpush1.msra.mxu0 0.0
    %274 = vmatprep.subr.mxu0 0.0
    %275 = vmatpush1.msra.mxu0 0.0
    %276 = vmatprep.subr.mxu0 0.0
    %277 = vmatpush1.msra.mxu0 0.0
    %278 = vmatprep.subr.mxu0 0.0
    %279 = vmatpush1.msra.mxu0 0.0
    %280 = vmatprep.subr.mxu0 0.0
    %281 = vmatpush1.msra.mxu0 0.0
    %282 = vmatprep.subr.mxu0 0.0
    %283 = vmatpush1.msra.mxu0 0.0
    %284 = vmatprep.subr.mxu0 0.0
    %285 = vmatpush1.msra.mxu0 0.0
    %286 = vmatprep.subr.mxu0 0.0
    %287 = vmatpush1.msra.mxu0 0.0
    %288 = vmatprep.subr.mxu0 0.0
    %289 = vmatpush1.msra.mxu0 0.0
    %290 = vmatprep.mubr.f32.mxu0 0.0
    %291 = vmatmul.mubr.f32.gmra.mrb[0].mxu0 %v209
    %v292 = vpop.f32.mrb[0].mxu0
    %v293 = vadd.f32 0.0, %v292
    %v294 = vpop.f32.mrb[0].mxu0
    %295 = vdwg.mxu0
    %296 = vmatprep.subr.mxu0 0.0
    %297 = vmatpush1.msra.mxu0 %v293
    %298 = vmatprep.subr.mxu0 0.0
    %299 = vmatpush1.msra.mxu0 0.0
    %300 = vmatprep.subr.mxu0 0.0
    %301 = vmatpush1.msra.mxu0 0.0
    %302 = vmatprep.subr.mxu0 0.0
    %303 = vmatpush1.msra.mxu0 0.0
    %304 = vmatprep.subr.mxu0 0.0
    %305 = vmatpush1.msra.mxu0 0.0
    %306 = vmatprep.subr.mxu0 0.0
    %307 = vmatpush1.msra.mxu0 0.0
    %308 = vmatprep.subr.mxu0 0.0
    %309 = vmatpush1.msra.mxu0 0.0
    %310 = vmatprep.subr.mxu0 0.0
    %311 = vmatpush1.msra.mxu0 0.0
    %312 = vmatprep.subr.mxu0 0.0
    %313 = vmatpush1.msra.mxu0 0.0
    %314 = vmatprep.subr.mxu0 0.0
    %315 = vmatpush1.msra.mxu0 0.0
    %316 = vmatprep.subr.mxu0 0.0
    %317 = vmatpush1.msra.mxu0 0.0
    %318 = vmatprep.subr.mxu0 0.0
    %319 = vmatpush1.msra.mxu0 0.0
    %320 = vmatprep.subr.mxu0 0.0
    %321 = vmatpush1.msra.mxu0 0.0
    %322 = vmatprep.subr.mxu0 0.0
    %323 = vmatpush1.msra.mxu0 0.0
    %324 = vmatprep.subr.mxu0 0.0
    %325 = vmatpush1.msra.mxu0 0.0
    %326 = vmatprep.subr.mxu0 0.0
    %327 = vmatpush1.msra.mxu0 0.0
    %328 = vmatprep.subr.mxu0 0.0
    %329 = vmatpush1.msra.mxu0 0.0
    %330 = vmatprep.subr.mxu0 0.0
    %331 = vmatpush1.msra.mxu0 0.0
    %332 = vmatprep.subr.mxu0 0.0
    %333 = vmatpush1.msra.mxu0 0.0
    %334 = vmatprep.subr.mxu0 0.0
    %335 = vmatpush1.msra.mxu0 0.0
    %336 = vmatprep.subr.mxu0 0.0
    %337 = vmatpush1.msra.mxu0 0.0
    %338 = vmatprep.subr.mxu0 0.0
    %339 = vmatpush1.msra.mxu0 0.0
    %340 = vmatprep.subr.mxu0 0.0
    %341 = vmatpush1.msra.mxu0 0.0
    %342 = vmatprep.subr.mxu0 0.0
    %343 = vmatpush1.msra.mxu0 0.0
    %344 = vmatprep.subr.mxu0 0.0
    %345 = vmatpush1.msra.mxu0 0.0
    %346 = vmatprep.subr.mxu0 0.0
    %347 = vmatpush1.msra.mxu0 0.0
    %348 = vmatprep.subr.mxu0 0.0
    %349 = vmatpush1.msra.mxu0 0.0
    %350 = vmatprep.subr.mxu0 0.0
    %351 = vmatpush1.msra.mxu0 0.0
    %352 = vmatprep.subr.mxu0 0.0
    %353 = vmatpush1.msra.mxu0 0.0
    %354 = vmatprep.subr.mxu0 0.0
    %355 = vmatpush1.msra.mxu0 0.0
    %356 = vmatprep.subr.mxu0 0.0
    %357 = vmatpush1.msra.mxu0 0.0
    %358 = vmatprep.subr.mxu0 0.0
    %359 = vmatpush1.msra.mxu0 0.0
    %360 = vmatprep.mubr.f32.mxu0 0.0
    %361 = vmatmul.mubr.f32.gmra.mrb[0].mxu0 %v124
    %v362 = vpop.f32.mrb[0].mxu0
    %v363 = vadd.f32 0.0, %v362
    %v364 = vpop.f32.mrb[0].mxu0
    %365 = vdwg.mxu0
    %366 = vadd.xlane.f32.xlu0 %v363
    %v367 = vpop.xlane.xlu0 %366
    %v368 = vmul.f32 %v367, 0.055555556
    %v369 = vmul.f32 %v363, %v363
    %370 = vadd.xlane.f32.xlu0 %v369
    %v371 = vpop.xlane.xlu0 %370
    %v372 = vmul.f32 %v371, 0.055555556
    %v373 = vmul.f32 %v368, %v368
    %v374 = vsub.f32 %v372, %v373
    %v375 = vmax.f32 %v374, 0.0
    %v376 = vadd.f32 %v375, 1e-05
    %v377 = vrsqrt.pop %v376
    %v378 = vsub.f32 %v363, %v368
    %v379 = vmul.f32 %v378, %v377
    %v380 = vld [vmem:[%s4] sm:$0xff]
    %v381 = vld [vmem:[%s4 + $0x8] sm:$0xff]
    %v382 = vld [vmem:[%s4 + $0x10] sm:$0xff]
    %v383 = vld [vmem:[%s4 + $0x18] sm:$0xff]
    %v384 = vld [vmem:[%s4 + $0x20] sm:$0xff]
    %v385 = vld [vmem:[%s4 + $0x28] sm:$0xff]
    %v386 = vld [vmem:[%s4 + $0x30] sm:$0xff]
    %v387 = vld [vmem:[%s4 + $0x38] sm:$0xff]
    %v388 = vld [vmem:[%s4 + $0x40] sm:$0xff]
    %v389 = vld [vmem:[%s4 + $0x48] sm:$0xff]
    %v390 = vld [vmem:[%s4 + $0x50] sm:$0xff]
    %v391 = vld [vmem:[%s4 + $0x58] sm:$0xff]
    %v392 = vld [vmem:[%s4 + $0x60] sm:$0xff]
    %v393 = vld [vmem:[%s4 + $0x68] sm:$0xff]
    %v394 = vld [vmem:[%s4 + $0x70] sm:$0xff]
    %v395 = vld [vmem:[%s4 + $0x78] sm:$0xff]
    %396 = vmatprep.subr.mxu0 0.0
    %397 = vmatpush1.msra.mxu0 %v380
    %398 = vmatprep.subr.mxu0 0.0
    %399 = vmatpush1.msra.mxu0 %v381
    %400 = vmatprep.subr.mxu0 0.0
    %401 = vmatpush1.msra.mxu0 %v382
    %402 = vmatprep.subr.mxu0 0.0
    %403 = vmatpush1.msra.mxu0 %v383
    %404 = vmatprep.subr.mxu0 0.0
    %405 = vmatpush1.msra.mxu0 %v384
    %406 = vmatprep.subr.mxu0 0.0
    %407 = vmatpush1.msra.mxu0 %v385
    %408 = vmatprep.subr.mxu0 0.0
    %409 = vmatpush1.msra.mxu0 %v386
    %410 = vmatprep.subr.mxu0 0.0
    %411 = vmatpush1.msra.mxu0 %v387
    %412 = vmatprep.subr.mxu0 0.0
    %413 = vmatpush1.msra.mxu0 %v388
    %414 = vmatprep.subr.mxu0 0.0
    %415 = vmatpush1.msra.mxu0 %v389
    %416 = vmatprep.subr.mxu0 0.0
    %417 = vmatpush1.msra.mxu0 %v390
    %418 = vmatprep.subr.mxu0 0.0
    %419 = vmatpush1.msra.mxu0 %v391
    %420 = vmatprep.subr.mxu0 0.0
    %421 = vmatpush1.msra.mxu0 %v392
    %422 = vmatprep.subr.mxu0 0.0
    %423 = vmatpush1.msra.mxu0 %v393
    %424 = vmatprep.subr.mxu0 0.0
    %425 = vmatpush1.msra.mxu0 %v394
    %426 = vmatprep.subr.mxu0 0.0
    %427 = vmatpush1.msra.mxu0 %v395
    %428 = vmatprep.subr.mxu0 0.0
    %429 = vmatpush1.msra.mxu0 0.0
    %430 = vmatprep.subr.mxu0 0.0
    %431 = vmatpush1.msra.mxu0 0.0
    %432 = vmatprep.subr.mxu0 0.0
    %433 = vmatpush1.msra.mxu0 0.0
    %434 = vmatprep.subr.mxu0 0.0
    %435 = vmatpush1.msra.mxu0 0.0
    %436 = vmatprep.subr.mxu0 0.0
    %437 = vmatpush1.msra.mxu0 0.0
    %438 = vmatprep.subr.mxu0 0.0
    %439 = vmatpush1.msra.mxu0 0.0
    %440 = vmatprep.subr.mxu0 0.0
    %441 = vmatpush1.msra.mxu0 0.0
    %442 = vmatprep.subr.mxu0 0.0
    %443 = vmatpush1.msra.mxu0 0.0
    %444 = vmatprep.subr.mxu0 0.0
    %445 = vmatpush1.msra.mxu0 0.0
    %446 = vmatprep.subr.mxu0 0.0
    %447 = vmatpush1.msra.mxu0 0.0
    %448 = vmatprep.subr.mxu0 0.0
    %449 = vmatpush1.msra.mxu0 0.0
    %450 = vmatprep.subr.mxu0 0.0
    %451 = vmatpush1.msra.mxu0 0.0
    %452 = vmatprep.subr.mxu0 0.0
    %453 = vmatpush1.msra.mxu0 0.0
    %454 = vmatprep.subr.mxu0 0.0
    %455 = vmatpush1.msra.mxu0 0.0
    %456 = vmatprep.subr.mxu0 0.0
    %457 = vmatpush1.msra.mxu0 0.0
    %458 = vmatprep.subr.mxu0 0.0
    %459 = vmatpush1.msra.mxu0 0.0
    %460 = vmatprep.mubr.f32.mxu0 0.0
    %461 = vmatmul.mubr.f32.gmra.mrb[0].mxu0 %v379
    %v462 = vpop.f32.mrb[0].mxu0
    %v463 = vadd.f32 0.0, %v462
    %v464 = vpop.f32.mrb[0].mxu0
    %465 = vdwg.mxu0
    %466 = vmatprep.subr.mxu0 0.0
    %467 = vmatpush1.msra.mxu0 %v463
    %468 = vmatprep.subr.mxu0 0.0
    %469 = vmatpush1.msra.mxu0 0.0
    %470 = vmatprep.subr.mxu0 0.0
    %471 = vmatpush1.msra.mxu0 0.0
    %472 = vmatprep.subr.mxu0 0.0
    %473 = vmatpush1.msra.mxu0 0.0
    %474 = vmatprep.subr.mxu0 0.0
    %475 = vmatpush1.msra.mxu0 0.0
    %476 = vmatprep.subr.mxu0 0.0
    %477 = vmatpush1.msra.mxu0 0.0
    %478 = vmatprep.subr.mxu0 0.0
    %479 = vmatpush1.msra.mxu0 0.0
    %480 = vmatprep.subr.mxu0 0.0
    %481 = vmatpush1.msra.mxu0 0.0
    %482 = vmatprep.subr.mxu0 0.0
    %483 = vmatpush1.msra.mxu0 0.0
    %484 = vmatprep.subr.mxu0 0.0
    %485 = vmatpush1.msra.mxu0 0.0
    %486 = vmatprep.subr.mxu0 0.0
    %487 = vmatpush1.msra.mxu0 0.0
    %488 = vmatprep.subr.mxu0 0.0
    %489 = vmatpush1.msra.mxu0 0.0
    %490 = vmatprep.subr.mxu0 0.0
    %491 = vmatpush1.msra.mxu0 0.0
    %492 = vmatprep.subr.mxu0 0.0
    %493 = vmatpush1.msra.mxu0 0.0
    %494 = vmatprep.subr.mxu0 0.0
    %495 = vmatpush1.msra.mxu0 0.0
    %496 = vmatprep.subr.mxu0 0.0
    %497 = vmatpush1.msra.mxu0 0.0
    %498 = vmatprep.subr.mxu0 0.0
    %499 = vmatpush1.msra.mxu0 0.0
    %500 = vmatprep.subr.mxu0 0.0
    %501 = vmatpush1.msra.mxu0 0.0
    %502 = vmatprep.subr.mxu0 0.0
    %503 = vmatpush1.msra.mxu0 0.0
    %504 = vmatprep.subr.mxu0 0.0
    %505 = vmatpush1.msra.mxu0 0.0
    %506 = vmatprep.subr.mxu0 0.0
    %507 = vmatpush1.msra.mxu0 0.0
    %508 = vmatprep.subr.mxu0 0.0
    %509 = vmatpush1.msra.mxu0 0.0
    %510 = vmatprep.subr.mxu0 0.0
    %511 = vmatpush1.msra.mxu0 0.0
    %512 = vmatprep.subr.mxu0 0.0
    %513 = vmatpush1.msra.mxu0 0.0
    %514 = vmatprep.subr.mxu0 0.0
    %515 = vmatpush1.msra.mxu0 0.0
    %516 = vmatprep.subr.mxu0 0.0
    %517 = vmatpush1.msra.mxu0 0.0
    %518 = vmatprep.subr.mxu0 0.0
    %519 = vmatpush1.msra.mxu0 0.0
    %520 = vmatprep.subr.mxu0 0.0
    %521 = vmatpush1.msra.mxu0 0.0
    %522 = vmatprep.subr.mxu0 0.0
    %523 = vmatpush1.msra.mxu0 0.0
    %524 = vmatprep.subr.mxu0 0.0
    %525 = vmatpush1.msra.mxu0 0.0
    %526 = vmatprep.subr.mxu0 0.0
    %527 = vmatpush1.msra.mxu0 0.0
    %528 = vmatprep.subr.mxu0 0.0
    %529 = vmatpush1.msra.mxu0 0.0
    %530 = vmatprep.mubr.f32.mxu0 0.0
    %531 = vmatmul.mubr.f32.gmra.mrb[0].mxu0 %v124
    %v532 = vpop.f32.mrb[0].mxu0
    %v533 = vadd.f32 0.0, %v532
    %v534 = vpop.f32.mrb[0].mxu0
    %535 = vdwg.mxu0
    %536 = vadd.xlane.f32.xlu0 %v533
    %v537 = vpop.xlane.xlu0 %536
    %v538 = vmul.f32 %v537, 0.055555556
    %v539 = vmul.f32 %v533, %v533
    %540 = vadd.xlane.f32.xlu0 %v539
    %v541 = vpop.xlane.xlu0 %540
    %v542 = vmul.f32 %v541, 0.055555556
    %v543 = vmul.f32 %v538, %v538
    %v544 = vsub.f32 %v542, %v543
    %v545 = vmax.f32 %v544, 0.0
    %v546 = vsub.f32 %v533, %v538
    %v547 = vadd.f32 %v545, 1e-05
    %v548 = vrsqrt.pop %v547
    %v549 = vmul.f32 %v546, %v548
    %v550 = vmul.f32 %v377, %v377
    %v551 = vmul.f32 %v375, %v550
    %v552 = vadd.f32 %v551, 1e-05
    %v553 = vrsqrt.pop %v552
    %v554 = vmul.f32 %v379, %v553
    %v555 = vadd.f32 %v549, %v554
    %556 = vst [vmem:[%s5] sm:$0xff] %v555
    // Predicated region
    $region26: #{model_forward.1} parent=1 // pred_check
      _
    $region27: #{model_forward.1} parent=1 // pred_check_branch
      %558 = sbr.rel (0) target = $region29
    $region28: #{model_forward.1} parent=1 // pred_region
      _
    $region29: #{model_forward.1} parent=1 // pred_fallthru
      _
    // Predicated region
    $region30: #{model_forward.1} parent=1 // pred_check
      _
    $region31: #{model_forward.1} parent=1 // pred_check_branch
      %560 = sbr.rel (0) target = $region33
    $region32: #{model_forward.1} parent=1 // pred_region
      _
    $region33: #{model_forward.1} parent=1 // pred_fallthru
      _
    %561 = vsyncpa [#allocation3], 1

</llo_original>
